<compile_context>
chip_gen: v5e
topology: v5e:2x2
jax: 0.10.0
libtpu: 0.0.40
codegen_flags: <defaults>
</compile_context>

<pallas_src>
import jax
import jax.numpy as jnp
from jax.experimental import pallas as pl
from jax.experimental.pallas import tpu as pltpu

_INV_SQRT2 = 0.7071067811865476


def _gelu_exact(x):
    # torch.nn.GELU() default == exact erf-based GELU.
    return 0.5 * x * (1.0 + jax.lax.erf(x * _INV_SQRT2))


def _make_kernel(itd_skip_connection, approx_gelu):
    gelu = (lambda x: jax.nn.gelu(x, approximate=True)) if approx_gelu else _gelu_exact

    def kernel(loc_ref, lish_ref, bm_ref, ph_ref, w1_ref,
               wout_ref, bout_ref, wi1_ref, bi1_ref, wi2_ref, bi2_ref,
               est_ref):
        """One batch tile per grid step.

        loc_ref : (TB, 3)         target locations (azimuth, elevation, distance)
        lish_ref: (TB, H)         folded listener contribution + hidden bias
        bm_ref  : (4, H)          [bmat.T | bmat.T]  (duplicated Fourier matrix)
        ph_ref  : (1, H)          phase row [0 ... 0 | pi/2 ... pi/2]
        w1_ref  : (H, H)          hidden fc weight.T (emb columns only)
        wout_ref: (H, OUT_PAD)    out_linear weight.T, lane-padded
        bout_ref: (1, OUT_PAD)    out_linear bias, lane-padded
        wi1_ref : (H, HI)         itd_net layer-1 weight.T
        bi1_ref : (1, HI)         itd_net layer-1 bias
        wi2_ref : (HI, OUT_PAD)   itd_net layer-2 weight.T, placed at lane OUT
        bi2_ref : (1, OUT_PAD)    itd_net layer-2 bias, placed at lane OUT
        est_ref : (TB, OUT_PAD)   estimate (lanes [0,OUT)) and itd (lane OUT) fused
        """
        loc = loc_ref[...]
        bm = bm_ref[...]                                     # (4, H)

        az = loc[:, 0:1]
        el = loc[:, 1:2]

        # Fourier projection on the VPU (4 broadcast FMAs), lane-dense via the phase trick:
        # sin(p + pi/2) == cos(p), so emb = sin(p_full) == [sin(p) | cos(p)].
        p = (jnp.sin(az) * bm[0:1, :] + jnp.cos(az) * bm[1:2, :]
             + jnp.sin(el) * bm[2:3, :] + jnp.cos(el) * bm[3:4, :]) + ph_ref[...]
        emb = jnp.sin(p)                                     # (TB, H)

        # Hidden MLP: fc over [emb | listener_emb]; the listener part and the fc bias are
        # pre-folded into lish_ref, so a single dense K=H MXU matmul remains.
        h = jnp.dot(emb, w1_ref[...], preferred_element_type=jnp.float32) + lish_ref[...]
        x = gelu(h)                                          # dropout == identity (eval)

        # itd_net layer 1 (optional skip connection x + emb folds into the same matmul).
        xi = x + emb if itd_skip_connection else x
        h2 = gelu(jnp.dot(xi, wi1_ref[...], preferred_element_type=jnp.float32)
                  + bi1_ref[...])                            # dropout == identity (eval)

        # out_linear + itd_net layer 2, fused into one lane-dense padded output slab:
        # lanes [0, OUT) carry the estimate, lane OUT carries the ITD scalar.
        est = (jnp.dot(x, wout_ref[...], preferred_element_type=jnp.float32)
               + bout_ref[...]
               + jnp.dot(h2, wi2_ref[...], preferred_element_type=jnp.float32)
               + bi2_ref[...])
        est_ref[...] = est.astype(est_ref.dtype)

    return kernel


def _round8(n):
    return max(8, ((n + 7) // 8) * 8)


def cbc_neural_field(ret_specs_db, ret_itds, tgt_loc, tgt_sidx, ret_sidxs,
                     bmat, embed_w, w1, b1, w_out, b_out,
                     w_itd1, b_itd1, w_itd2, b_itd2,
                     *, itd_skip_connection=False, approx_gelu=False, block_b=512):
    """Mirrors CbCNeuralField.forward (eval mode).

    tgt_loc:[B,3], tgt_sidx:[B] int, bmat:[H/2,4], embed_w:[E,n_listeners] (Linear weight),
    w1:[H,H+E], b1:[H], w_out:[OUT,H], b_out:[OUT], w_itd1:[HI,H], b_itd1:[HI],
    w_itd2:[1,HI], b_itd2:[1]  ->  (estimate [B,2,OUT/2], itd [B,1]).
    """
    del ret_specs_db, ret_itds, ret_sidxs   # unused: neural field without retrievals

    f32 = jnp.float32
    B = tgt_loc.shape[0]
    H = w1.shape[0]                          # hidden_features
    HF2 = bmat.shape[0]                      # hidden_features // 2
    OUT = w_out.shape[0]                     # out_features
    HI = w_itd1.shape[0]                     # itd_net hidden width
    assert H == 2 * HF2
    assert w1.shape[1] == H + embed_w.shape[0], "only hidden_layers == 1 is supported"

    # ITD scalar rides in the first spare padding lane of the estimate slab.
    OUT_PAD = ((OUT + 1 + 127) // 128) * 128
    ITD_COL = OUT

    # ---- parameter-only preprocessing (wrapper side, O(params)) ----
    bm_t = bmat.T.astype(f32)                                    # (4, HF2)
    bm_full = jnp.concatenate([bm_t, bm_t], axis=1)              # (4, H)
    phase = jnp.concatenate([jnp.zeros((1, HF2), f32),
                             jnp.full((1, HF2), jnp.pi / 2, f32)], axis=1)   # (1, H)
    w1_emb_t = w1[:, :H].T.astype(f32)                           # (H, H)
    # Fold: one_hot(sidx) @ embed_w.T @ w1[:, H:].T + b1  ==  table[sidx]
    lis_table = ((w1[:, H:] @ embed_w).T + b1[None, :]).astype(f32)   # (n_listeners, H)
    lis_h = jnp.take(lis_table, tgt_sidx, axis=0)                # (B, H)

    w_out_pad = jnp.zeros((H, OUT_PAD), f32).at[:, :OUT].set(w_out.T)
    b_out_pad = jnp.zeros((1, OUT_PAD), f32).at[0, :OUT].set(b_out)
    w_i1_t = w_itd1.T.astype(f32)                                # (H, HI)
    b_i1_r = b_itd1.reshape(1, HI).astype(f32)
    w_i2_pad = jnp.zeros((HI, OUT_PAD), f32).at[:, ITD_COL:ITD_COL + 1].set(w_itd2.T)
    b_i2_pad = jnp.zeros((1, OUT_PAD), f32).at[0, ITD_COL].set(b_itd2[0])

    # ---- batch tiling: balanced multiple-of-8 tiles; >=2 grid steps when possible so
    # the "parallel" axis can split across v7x's two TensorCores. ----
    n_tiles = max(1, -(-B // block_b))
    if n_tiles == 1 and B > 8:
        n_tiles = 2
    TB = _round8(-(-B // n_tiles))
    B_pad = TB * n_tiles
    pad = B_pad - B
    loc_p = jnp.pad(tgt_loc.astype(f32), ((0, pad), (0, 0)))
    lis_p = jnp.pad(lis_h, ((0, pad), (0, 0)))

    kernel = _make_kernel(itd_skip_connection, approx_gelu)

    # VMEM budget: resident weights ~0.4 MiB + 2x double-buffered (TB,H)/(TB,OUT_PAD)
    # tiles ~2.6 MiB at TB=512 -> far below the 32 MiB default scoped limit on every
    # generation (v7x physical VMEM is 64 MiB); no vmem_limit_bytes override needed.
    est_pad = pl.pallas_call(
        kernel,
        out_shape=jax.ShapeDtypeStruct((B_pad, OUT_PAD), f32),
        grid_spec=pltpu.PrefetchScalarGridSpec(
            num_scalar_prefetch=0,
            grid=(n_tiles,),
            in_specs=[
                pl.BlockSpec((TB, 3), lambda i: (i, 0)),          # tgt_loc
                pl.BlockSpec((TB, H), lambda i: (i, 0)),          # folded listener + b1
                pl.BlockSpec((4, H), lambda i: (0, 0)),           # [bmat.T | bmat.T]
                pl.BlockSpec((1, H), lambda i: (0, 0)),           # phase row
                pl.BlockSpec((H, H), lambda i: (0, 0)),           # w1 (emb columns).T
                pl.BlockSpec((H, OUT_PAD), lambda i: (0, 0)),     # out weight (padded)
                pl.BlockSpec((1, OUT_PAD), lambda i: (0, 0)),     # out bias (padded)
                pl.BlockSpec((H, HI), lambda i: (0, 0)),          # itd layer-1 weight
                pl.BlockSpec((1, HI), lambda i: (0, 0)),          # itd layer-1 bias
                pl.BlockSpec((HI, OUT_PAD), lambda i: (0, 0)),    # itd layer-2 weight (fused)
                pl.BlockSpec((1, OUT_PAD), lambda i: (0, 0)),     # itd layer-2 bias (fused)
            ],
            out_specs=pl.BlockSpec((TB, OUT_PAD), lambda i: (i, 0)),
        ),
        compiler_params=pltpu.CompilerParams(
            dimension_semantics=("parallel",)),
    )(loc_p, lis_p, bm_full, phase, w1_emb_t, w_out_pad, b_out_pad,
      w_i1_t, b_i1_r, w_i2_pad, b_i2_pad)

    # NOTE: consumers that can accept (B, OUT) should skip this reshape (it forces an
    # XLA relayout of a 129-lane last dim); kept here to match the module's return shape.
    estimate = est_pad[:B, :OUT].reshape(B, 2, OUT // 2)
    itd = est_pad[:B, ITD_COL:ITD_COL + 1]
    return estimate, itd


def _cbc_reference(tgt_loc, tgt_sidx, bmat, embed_w, w1, b1, w_out, b_out,
                   w_itd1, b_itd1, w_itd2, b_itd2, n_listeners,
                   itd_skip_connection=False):
    """Pure-JAX reference mirroring the PyTorch forward literally (eval mode)."""
    az, el = tgt_loc[:, 0], tgt_loc[:, 1]
    onehot = jax.nn.one_hot(tgt_sidx, n_listeners, dtype=jnp.float32)
    listener_emb = onehot @ embed_w.T
    trig = jnp.stack([jnp.sin(az), jnp.cos(az), jnp.sin(el), jnp.cos(el)], axis=-1)
    emb = trig @ bmat.T
    emb = jnp.concatenate([jnp.sin(emb), jnp.cos(emb)], axis=-1)
    x = jnp.concatenate([emb, listener_emb], axis=-1)
    x = _gelu_exact(x @ w1.T + b1)                               # dropout = identity
    estimate = (x @ w_out.T + b_out).reshape(x.shape[0], 2, -1)
    x_itd = x + emb if itd_skip_connection else x
    h2 = _gelu_exact(x_itd @ w_itd1.T + b_itd1)                  # dropout = identity
    itd = h2 @ w_itd2.T + b_itd2
    return estimate, itd


if __name__ == "__main__":
    B = 8
    HIDDEN, EMBED, OUT, NLIS = 128, 32, 258, 210   # module defaults

    key = jax.random.PRNGKey(0)
    keys = jax.random.split(key, 12)

    tgt_loc = jax.random.normal(keys[0], (B, 3), jnp.float32)
    tgt_sidx = jax.random.randint(keys[1], (B,), 0, NLIS)

    bmat = jax.random.normal(keys[2], (HIDDEN // 2, 4), jnp.float32)      # scale=1, frozen
    embed_w = jax.random.normal(keys[3], (EMBED, NLIS), jnp.float32) * (1.0 / NLIS ** 0.5)

    def linear_init(kw, kb, outf, inf):
        bound = 1.0 / (inf ** 0.5)
        w = jax.random.uniform(kw, (outf, inf), jnp.float32, -bound, bound)
        bias = jax.random.uniform(kb, (outf,), jnp.float32, -bound, bound)
        return w, bias

    w1, b1 = linear_init(keys[4], keys[5], HIDDEN, HIDDEN + EMBED)        # hidden_mlps[0]
    w_out, b_out = linear_init(keys[6], keys[7], OUT, HIDDEN)             # out_linear
    w_i1, b_i1 = linear_init(keys[8], keys[9], HIDDEN // 2, HIDDEN)       # itd_net[0]
    w_i2, b_i2 = linear_init(keys[10], keys[11], 1, HIDDEN // 2)          # itd_net[1]

    for skip in (False, True):   # exercise both itd_skip_connection paths
        est, itd = cbc_neural_field(None, None, tgt_loc, tgt_sidx, None,
                                    bmat, embed_w, w1, b1, w_out, b_out,
                                    w_i1, b_i1, w_i2, b_i2,
                                    itd_skip_connection=skip)
        est, itd = jax.block_until_ready((est, itd))

        ref_est, ref_itd = _cbc_reference(tgt_loc, tgt_sidx, bmat, embed_w, w1, b1,
                                          w_out, b_out, w_i1, b_i1, w_i2, b_i2, NLIS,
                                          itd_skip_connection=skip)

        assert est.shape == (B, 2, OUT // 2), est.shape
        assert itd.shape == (B, 1), itd.shape
        err_e = float(jnp.max(jnp.abs(est - ref_est)))
        err_i = float(jnp.max(jnp.abs(itd - ref_itd)))
        assert jnp.allclose(est, ref_est, atol=1e-4, rtol=1e-4), (skip, err_e)
        assert jnp.allclose(itd, ref_itd, atol=1e-4, rtol=1e-4), (skip, err_i)

    print("KERNEL_OK")
</pallas_src>

<mosaic_0001>
module attributes {stable_mosaic.version = 11 : i64} {
  func.func @kernel(%arg0: i32, %arg1: memref<8x3xf32, #tpu.memory_space<vmem>>, %arg2: memref<8x128xf32, #tpu.memory_space<vmem>>, %arg3: memref<4x128xf32, #tpu.memory_space<vmem>>, %arg4: memref<1x128xf32, #tpu.memory_space<vmem>>, %arg5: memref<128x128xf32, #tpu.memory_space<vmem>>, %arg6: memref<128x384xf32, #tpu.memory_space<vmem>>, %arg7: memref<1x384xf32, #tpu.memory_space<vmem>>, %arg8: memref<128x64xf32, #tpu.memory_space<vmem>>, %arg9: memref<1x64xf32, #tpu.memory_space<vmem>>, %arg10: memref<64x384xf32, #tpu.memory_space<vmem>>, %arg11: memref<1x384xf32, #tpu.memory_space<vmem>>, %arg12: memref<8x384xf32, #tpu.memory_space<vmem>>) attributes {dimension_semantics = [#tpu.dimension_semantics<parallel>], iteration_bounds = array<i64: 1>, scalar_prefetch = 0 : i64, scratch_operands = 0 : i64, tpu.core_type = #tpu.core_type<tc>, window_params = [{transform_indices = @transform_0, window_bounds = array<i64: 8, 3>}, {transform_indices = @transform_1, window_bounds = array<i64: 8, 128>}, {pipeline_mode = #tpu.pipeline_mode<synchronous>, transform_indices = @transform_2, window_bounds = array<i64: 4, 128>}, {pipeline_mode = #tpu.pipeline_mode<synchronous>, transform_indices = @transform_3, window_bounds = array<i64: 1, 128>}, {pipeline_mode = #tpu.pipeline_mode<synchronous>, transform_indices = @transform_4, window_bounds = array<i64: 128, 128>}, {pipeline_mode = #tpu.pipeline_mode<synchronous>, transform_indices = @transform_5, window_bounds = array<i64: 128, 384>}, {pipeline_mode = #tpu.pipeline_mode<synchronous>, transform_indices = @transform_6, window_bounds = array<i64: 1, 384>}, {pipeline_mode = #tpu.pipeline_mode<synchronous>, transform_indices = @transform_7, window_bounds = array<i64: 128, 64>}, {pipeline_mode = #tpu.pipeline_mode<synchronous>, transform_indices = @transform_8, window_bounds = array<i64: 1, 64>}, {pipeline_mode = #tpu.pipeline_mode<synchronous>, transform_indices = @transform_9, window_bounds = array<i64: 64, 384>}, {pipeline_mode = #tpu.pipeline_mode<synchronous>, transform_indices = @transform_10, window_bounds = array<i64: 1, 384>}, {transform_indices = @transform_11, window_bounds = array<i64: 8, 384>}]} {
    %c0 = arith.constant 0 : index
    %c0_0 = arith.constant 0 : index
    %0 = vector.load %arg1[%c0, %c0_0] : memref<8x3xf32, #tpu.memory_space<vmem>>, vector<8x3xf32>
    %c0_1 = arith.constant 0 : index
    %c0_2 = arith.constant 0 : index
    %1 = vector.load %arg3[%c0_1, %c0_2] : memref<4x128xf32, #tpu.memory_space<vmem>>, vector<4x128xf32>
    %2 = vector.extract_strided_slice %0 {offsets = [0, 0], sizes = [8, 1], strides = [1, 1]} : vector<8x3xf32> to vector<8x1xf32>
    %3 = vector.extract_strided_slice %0 {offsets = [0, 1], sizes = [8, 1], strides = [1, 1]} : vector<8x3xf32> to vector<8x1xf32>
    %4 = math.sin %2 : vector<8x1xf32>
    %5 = vector.extract_strided_slice %1 {offsets = [0, 0], sizes = [1, 128], strides = [1, 1]} : vector<4x128xf32> to vector<1x128xf32>
    %6 = vector.broadcast %4 : vector<8x1xf32> to vector<8x128xf32>
    %7 = vector.broadcast %5 : vector<1x128xf32> to vector<8x128xf32>
    %8 = arith.mulf %6, %7 : vector<8x128xf32>
    %9 = math.cos %2 : vector<8x1xf32>
    %10 = vector.extract_strided_slice %1 {offsets = [1, 0], sizes = [1, 128], strides = [1, 1]} : vector<4x128xf32> to vector<1x128xf32>
    %11 = vector.broadcast %9 : vector<8x1xf32> to vector<8x128xf32>
    %12 = vector.broadcast %10 : vector<1x128xf32> to vector<8x128xf32>
    %13 = arith.mulf %11, %12 : vector<8x128xf32>
    %14 = arith.addf %8, %13 : vector<8x128xf32>
    %15 = math.sin %3 : vector<8x1xf32>
    %16 = vector.extract_strided_slice %1 {offsets = [2, 0], sizes = [1, 128], strides = [1, 1]} : vector<4x128xf32> to vector<1x128xf32>
    %17 = vector.broadcast %15 : vector<8x1xf32> to vector<8x128xf32>
    %18 = vector.broadcast %16 : vector<1x128xf32> to vector<8x128xf32>
    %19 = arith.mulf %17, %18 : vector<8x128xf32>
    %20 = arith.addf %14, %19 : vector<8x128xf32>
    %21 = math.cos %3 : vector<8x1xf32>
    %22 = vector.extract_strided_slice %1 {offsets = [3, 0], sizes = [1, 128], strides = [1, 1]} : vector<4x128xf32> to vector<1x128xf32>
    %23 = vector.broadcast %21 : vector<8x1xf32> to vector<8x128xf32>
    %24 = vector.broadcast %22 : vector<1x128xf32> to vector<8x128xf32>
    %25 = arith.mulf %23, %24 : vector<8x128xf32>
    %26 = arith.addf %20, %25 : vector<8x128xf32>
    %c0_3 = arith.constant 0 : index
    %c0_4 = arith.constant 0 : index
    %27 = vector.load %arg4[%c0_3, %c0_4] : memref<1x128xf32, #tpu.memory_space<vmem>>, vector<1x128xf32>
    %28 = vector.broadcast %27 : vector<1x128xf32> to vector<8x128xf32>
    %29 = arith.addf %26, %28 : vector<8x128xf32>
    %30 = math.sin %29 : vector<8x128xf32>
    %c0_5 = arith.constant 0 : index
    %c0_6 = arith.constant 0 : index
    %31 = vector.load %arg5[%c0_5, %c0_6] : memref<128x128xf32, #tpu.memory_space<vmem>>, vector<128x128xf32>
    %cst = arith.constant dense<0.000000e+00> : vector<8x128xf32>
    %32 = tpu.matmul %30, %31, %cst {dimension_numbers = #tpu.dot_dimension_numbers<[1], [0], [0], [1], [0, 0, 1, 1], [], []>} : vector<8x128xf32>, vector<128x128xf32>, vector<8x128xf32> -> vector<8x128xf32>
    %c0_7 = arith.constant 0 : index
    %c0_8 = arith.constant 0 : index
    %33 = vector.load %arg2[%c0_7, %c0_8] : memref<8x128xf32, #tpu.memory_space<vmem>>, vector<8x128xf32>
    %34 = arith.addf %32, %33 : vector<8x128xf32>
    %cst_9 = arith.constant 5.000000e-01 : f32
    %35 = vector.broadcast %cst_9 : f32 to vector<8x128xf32>
    %36 = arith.mulf %35, %34 : vector<8x128xf32>
    %cst_10 = arith.constant 0.707106769 : f32
    %37 = vector.broadcast %cst_10 : f32 to vector<8x128xf32>
    %38 = arith.mulf %34, %37 : vector<8x128xf32>
    %39 = math.erf %38 : vector<8x128xf32>
    %cst_11 = arith.constant 1.000000e+00 : f32
    %40 = vector.broadcast %cst_11 : f32 to vector<8x128xf32>
    %41 = arith.addf %40, %39 : vector<8x128xf32>
    %42 = arith.mulf %36, %41 : vector<8x128xf32>
    %c0_12 = arith.constant 0 : index
    %c0_13 = arith.constant 0 : index
    %43 = vector.load %arg8[%c0_12, %c0_13] : memref<128x64xf32, #tpu.memory_space<vmem>>, vector<128x64xf32>
    %cst_14 = arith.constant dense<0.000000e+00> : vector<8x64xf32>
    %44 = tpu.matmul %42, %43, %cst_14 {dimension_numbers = #tpu.dot_dimension_numbers<[1], [0], [0], [1], [0, 0, 1, 1], [], []>} : vector<8x128xf32>, vector<128x64xf32>, vector<8x64xf32> -> vector<8x64xf32>
    %c0_15 = arith.constant 0 : index
    %c0_16 = arith.constant 0 : index
    %45 = vector.load %arg9[%c0_15, %c0_16] : memref<1x64xf32, #tpu.memory_space<vmem>>, vector<1x64xf32>
    %46 = vector.broadcast %45 : vector<1x64xf32> to vector<8x64xf32>
    %47 = arith.addf %44, %46 : vector<8x64xf32>
    %cst_17 = arith.constant 5.000000e-01 : f32
    %48 = vector.broadcast %cst_17 : f32 to vector<8x64xf32>
    %49 = arith.mulf %48, %47 : vector<8x64xf32>
    %cst_18 = arith.constant 0.707106769 : f32
    %50 = vector.broadcast %cst_18 : f32 to vector<8x64xf32>
    %51 = arith.mulf %47, %50 : vector<8x64xf32>
    %52 = math.erf %51 : vector<8x64xf32>
    %cst_19 = arith.constant 1.000000e+00 : f32
    %53 = vector.broadcast %cst_19 : f32 to vector<8x64xf32>
    %54 = arith.addf %53, %52 : vector<8x64xf32>
    %55 = arith.mulf %49, %54 : vector<8x64xf32>
    %c0_20 = arith.constant 0 : index
    %c0_21 = arith.constant 0 : index
    %56 = vector.load %arg6[%c0_20, %c0_21] : memref<128x384xf32, #tpu.memory_space<vmem>>, vector<128x384xf32>
    %cst_22 = arith.constant dense<0.000000e+00> : vector<8x384xf32>
    %57 = tpu.matmul %42, %56, %cst_22 {dimension_numbers = #tpu.dot_dimension_numbers<[1], [0], [0], [1], [0, 0, 1, 1], [], []>} : vector<8x128xf32>, vector<128x384xf32>, vector<8x384xf32> -> vector<8x384xf32>
    %c0_23 = arith.constant 0 : index
    %c0_24 = arith.constant 0 : index
    %58 = vector.load %arg7[%c0_23, %c0_24] : memref<1x384xf32, #tpu.memory_space<vmem>>, vector<1x384xf32>
    %59 = vector.broadcast %58 : vector<1x384xf32> to vector<8x384xf32>
    %60 = arith.addf %57, %59 : vector<8x384xf32>
    %c0_25 = arith.constant 0 : index
    %c0_26 = arith.constant 0 : index
    %61 = vector.load %arg10[%c0_25, %c0_26] : memref<64x384xf32, #tpu.memory_space<vmem>>, vector<64x384xf32>
    %cst_27 = arith.constant dense<0.000000e+00> : vector<8x384xf32>
    %62 = tpu.matmul %55, %61, %cst_27 {dimension_numbers = #tpu.dot_dimension_numbers<[1], [0], [0], [1], [0, 0, 1, 1], [], []>} : vector<8x64xf32>, vector<64x384xf32>, vector<8x384xf32> -> vector<8x384xf32>
    %63 = arith.addf %60, %62 : vector<8x384xf32>
    %c0_28 = arith.constant 0 : index
    %c0_29 = arith.constant 0 : index
    %64 = vector.load %arg11[%c0_28, %c0_29] : memref<1x384xf32, #tpu.memory_space<vmem>>, vector<1x384xf32>
    %65 = vector.broadcast %64 : vector<1x384xf32> to vector<8x384xf32>
    %66 = arith.addf %63, %65 : vector<8x384xf32>
    %c0_30 = arith.constant 0 : index
    %c0_31 = arith.constant 0 : index
    %67 = vector.load %arg12[%c0_30, %c0_31] : memref<8x384xf32, #tpu.memory_space<vmem>>, vector<8x384xf32>
    tpu.vector_store %arg12[%c0_30, %c0_31], %66 {strides = array<i32>} : memref<8x384xf32, #tpu.memory_space<vmem>>, vector<8x384xf32>,
    return
  }
  func.func @transform_0(%arg0: i32) -> (i32, i32) {
    %c0_i32 = arith.constant 0 : i32
    %c0_i32_0 = arith.constant 0 : i32
    return %arg0, %c0_i32 : i32, i32
  }
  func.func @transform_1(%arg0: i32) -> (i32, i32) {
    %c0_i32 = arith.constant 0 : i32
    %c0_i32_0 = arith.constant 0 : i32
    return %arg0, %c0_i32 : i32, i32
  }
  func.func @transform_2(%arg0: i32) -> (i32, i32) {
    %c0_i32 = arith.constant 0 : i32
    %c0_i32_0 = arith.constant 0 : i32
    %c0_i32_1 = arith.constant 0 : i32
    return %c0_i32, %c0_i32_0 : i32, i32
  }
  func.func @transform_3(%arg0: i32) -> (i32, i32) {
    %c0_i32 = arith.constant 0 : i32
    %c0_i32_0 = arith.constant 0 : i32
    %c0_i32_1 = arith.constant 0 : i32
    return %c0_i32, %c0_i32_0 : i32, i32
  }
  func.func @transform_4(%arg0: i32) -> (i32, i32) {
    %c0_i32 = arith.constant 0 : i32
    %c0_i32_0 = arith.constant 0 : i32
    %c0_i32_1 = arith.constant 0 : i32
    return %c0_i32, %c0_i32_0 : i32, i32
  }
  func.func @transform_5(%arg0: i32) -> (i32, i32) {
    %c0_i32 = arith.constant 0 : i32
    %c0_i32_0 = arith.constant 0 : i32
    %c0_i32_1 = arith.constant 0 : i32
    return %c0_i32, %c0_i32_0 : i32, i32
  }
  func.func @transform_6(%arg0: i32) -> (i32, i32) {
    %c0_i32 = arith.constant 0 : i32
    %c0_i32_0 = arith.constant 0 : i32
    %c0_i32_1 = arith.constant 0 : i32
    return %c0_i32, %c0_i32_0 : i32, i32
  }
  func.func @transform_7(%arg0: i32) -> (i32, i32) {
    %c0_i32 = arith.constant 0 : i32
    %c0_i32_0 = arith.constant 0 : i32
    %c0_i32_1 = arith.constant 0 : i32
    return %c0_i32, %c0_i32_0 : i32, i32
  }
  func.func @transform_8(%arg0: i32) -> (i32, i32) {
    %c0_i32 = arith.constant 0 : i32
    %c0_i32_0 = arith.constant 0 : i32
    %c0_i32_1 = arith.constant 0 : i32
    return %c0_i32, %c0_i32_0 : i32, i32
  }
  func.func @transform_9(%arg0: i32) -> (i32, i32) {
    %c0_i32 = arith.constant 0 : i32
    %c0_i32_0 = arith.constant 0 : i32
    %c0_i32_1 = arith.constant 0 : i32
    return %c0_i32, %c0_i32_0 : i32, i32
  }
  func.func @transform_10(%arg0: i32) -> (i32, i32) {
    %c0_i32 = arith.constant 0 : i32
    %c0_i32_0 = arith.constant 0 : i32
    %c0_i32_1 = arith.constant 0 : i32
    return %c0_i32, %c0_i32_0 : i32, i32
  }
  func.func @transform_11(%arg0: i32) -> (i32, i32) {
    %c0_i32 = arith.constant 0 : i32
    %c0_i32_0 = arith.constant 0 : i32
    return %arg0, %c0_i32 : i32, i32
  }
}

</mosaic_0001>

<llo_original>
// kernel: tpu_custom_call.1
$region0: #{tpu_custom_call.1}
  #allocation0 [shape = 'u32[]', space=smem, size = 0x4, offset = 0x4, fixed_abs, tag = 'smem constant byte address 0x4 - core index']
  #allocation1 [shape = 'u32[72,128]{1,0:T(1,128)}', space=vmem, size = 0x9000, scoped, tag = 'internal scratch']
  %s0 = inlined_call_operand.vmem [shape: f32[8,3], index: 0, kind: input, shape index: {}]
  %s1 = inlined_call_operand.vmem [shape: f32[8,128], index: 1, kind: input, shape index: {}]
  %s2 = inlined_call_operand.vmem [shape: f32[4,128], index: 2, kind: input, shape index: {}]
  %s3 = inlined_call_operand.vmem [shape: f32[1,128], index: 3, kind: input, shape index: {}]
  %s4 = inlined_call_operand.hbm [shape: f32[128,128], index: 4, kind: input, shape index: {}]
  %s5 = inlined_call_operand.hbm [shape: f32[128,384], index: 5, kind: input, shape index: {}]
  %s6 = inlined_call_operand.vmem [shape: f32[1,384], index: 6, kind: input, shape index: {}]
  %s7 = inlined_call_operand.vmem [shape: f32[128,64], index: 7, kind: input, shape index: {}]
  %s8 = inlined_call_operand.vmem [shape: f32[1,64], index: 8, kind: input, shape index: {}]
  %s9 = inlined_call_operand.vmem [shape: f32[64,384], index: 9, kind: input, shape index: {}]
  %s10 = inlined_call_operand.vmem [shape: f32[1,384], index: 10, kind: input, shape index: {}]
  %s11 = inlined_call_operand.hbm [shape: f32[8,384], index: 11, kind: output, shape index: {}]
  %s12 = sld [smem:[#allocation0]]
  $region62: #{tpu_custom_call.1} parent=0
    _
  %s14 = ssub.s32 1, %s12
  %s15 = scalar_select 0, %s14, %s12
  $region1: #{tpu_custom_call.1} parent=0
    #allocation2 [shape = 'u8[65536]{0}', space=vmem, size = 0x10000, scoped, tag = 'input window, operand 4, single buffered']
    #allocation3 [shape = 's32[1]{0}', space=sflag, size = 0x4, scoped, tag = 'scoped memory for tpu_custom_call.1']
    #allocation4 [shape = 's32[1]{0}', space=sflag, size = 0x4, scoped, tag = 'scoped memory for tpu_custom_call.1']
    #allocation5 [shape = 'u8[196608]{0}', space=vmem, size = 0x30000, scoped, tag = 'input window, operand 5, single buffered']
    #allocation6 [shape = 's32[1]{0}', space=sflag, size = 0x4, scoped, tag = 'scoped memory for tpu_custom_call.1']
    #allocation7 [shape = 'u8[12288]{0}', space=vmem, size = 0x3000, scoped, tag = 'output window, operand 0, single buffered']
    %16 = vsyncpa [#allocation3], 0
    %17 = vsyncpa [#allocation6], 0
    %18 = vsyncpa [#allocation4], 0
    // Predicated region
    $region2: #{tpu_custom_call.1} parent=1 // pred_check
      _
    $region3: #{tpu_custom_call.1} parent=1 // pred_check_branch
      %20 = sbr.rel (0) target = $region5
    $region4: #{tpu_custom_call.1} parent=1 // pred_region
      _
    $region5: #{tpu_custom_call.1} parent=1 // pred_fallthru
      _
    // Predicated region
    $region6: #{tpu_custom_call.1} parent=1 // pred_check
      _
    $region7: #{tpu_custom_call.1} parent=1 // pred_check_branch
      %22 = sbr.rel (0) target = $region9
    $region8: #{tpu_custom_call.1} parent=1 // pred_region
      _
    $region9: #{tpu_custom_call.1} parent=1 // pred_fallthru
      _
    // Predicated region
    $region10: #{tpu_custom_call.1} parent=1 // pred_check
      _
    $region11: #{tpu_custom_call.1} parent=1 // pred_check_branch
      %24 = sbr.rel (0) target = $region13
    $region12: #{tpu_custom_call.1} parent=1 // pred_region
      _
    $region13: #{tpu_custom_call.1} parent=1 // pred_fallthru
      _
    // Predicated region
    $region14: #{tpu_custom_call.1} parent=1 // pred_check
      _
    $region15: #{tpu_custom_call.1} parent=1 // pred_check_branch
      %26 = sbr.rel (0) target = $region17
    $region16: #{tpu_custom_call.1} parent=1 // pred_region
      _
    $region17: #{tpu_custom_call.1} parent=1 // pred_fallthru
      _
    // Predicated region
    $region18: #{tpu_custom_call.1} parent=1 // pred_check
      _
    $region19: #{tpu_custom_call.1} parent=1 // pred_check_branch
      %28 = sbr.rel (0) target = $region21
    $region20: #{tpu_custom_call.1} parent=1 // pred_region
      %30 = vsyncadd [#allocation3], 0
      %s31 = sshll.u32 %s4, 4
      %s32 = int_to_ptr.hbm [resolvable:$true] %s31
      %s33 = sshll.u32 [#allocation2], 4
      %s34 = int_to_ptr.vmem [resolvable:$true] %s33
      %39 = dma.hbm_to_vmem [thread:$0]  %s32, 2048, %s34, [#allocation3], 128, 128, 8
    $region21: #{tpu_custom_call.1} parent=1 // pred_fallthru
      _
    // Predicated region
    $region22: #{tpu_custom_call.1} parent=1 // pred_check
      _
    $region23: #{tpu_custom_call.1} parent=1 // pred_check_branch
      %41 = sbr.rel (0) target = $region25
    $region24: #{tpu_custom_call.1} parent=1 // pred_region
      %43 = vsyncadd [#allocation6], 0
      %s44 = sshll.u32 %s5, 4
      %s45 = int_to_ptr.hbm [resolvable:$true] %s44
      %s46 = sshll.u32 [#allocation5], 4
      %s47 = int_to_ptr.vmem [resolvable:$true] %s46
      %52 = dma.hbm_to_vmem [thread:$0]  %s45, 6144, %s47, [#allocation6], 384, 384, 24
    $region25: #{tpu_custom_call.1} parent=1 // pred_fallthru
      _
    // Predicated region
    $region26: #{tpu_custom_call.1} parent=1 // pred_check
      _
    $region27: #{tpu_custom_call.1} parent=1 // pred_check_branch
      %54 = sbr.rel (0) target = $region29
    $region28: #{tpu_custom_call.1} parent=1 // pred_region
      _
    $region29: #{tpu_custom_call.1} parent=1 // pred_fallthru
      _
    // Predicated region
    $region30: #{tpu_custom_call.1} parent=1 // pred_check
      _
    $region31: #{tpu_custom_call.1} parent=1 // pred_check_branch
      %56 = sbr.rel (0) target = $region33
    $region32: #{tpu_custom_call.1} parent=1 // pred_region
      _
    $region33: #{tpu_custom_call.1} parent=1 // pred_fallthru
      _
    // Predicated region
    $region34: #{tpu_custom_call.1} parent=1 // pred_check
      _
    $region35: #{tpu_custom_call.1} parent=1 // pred_check_branch
      %58 = sbr.rel (0) target = $region37
    $region36: #{tpu_custom_call.1} parent=1 // pred_region
      _
    $region37: #{tpu_custom_call.1} parent=1 // pred_fallthru
      _
    // Predicated region
    $region38: #{tpu_custom_call.1} parent=1 // pred_check
      _
    $region39: #{tpu_custom_call.1} parent=1 // pred_check_branch
      %60 = sbr.rel (0) target = $region41
    $region40: #{tpu_custom_call.1} parent=1 // pred_region
      _
    $region41: #{tpu_custom_call.1} parent=1 // pred_fallthru
      _
    // Predicated region
    $region42: #{tpu_custom_call.1} parent=1 // pred_check
      _
    $region43: #{tpu_custom_call.1} parent=1 // pred_check_branch
      %62 = sbr.rel (0) target = $region45
    $region44: #{tpu_custom_call.1} parent=1 // pred_region
      _
    $region45: #{tpu_custom_call.1} parent=1 // pred_fallthru
      _
    // Predicated region
    $region46: #{tpu_custom_call.1} parent=1 // pred_check
      _
    $region47: #{tpu_custom_call.1} parent=1 // pred_check_branch
      %64 = sbr.rel (0) target = $region49
    $region48: #{tpu_custom_call.1} parent=1 // pred_region
      %66 = dma.done [#allocation3], 2048
    $region49: #{tpu_custom_call.1} parent=1 // pred_fallthru
      _
    // Predicated region
    $region50: #{tpu_custom_call.1} parent=1 // pred_check
      _
    $region51: #{tpu_custom_call.1} parent=1 // pred_check_branch
      %68 = sbr.rel (0) target = $region53
    $region52: #{tpu_custom_call.1} parent=1 // pred_region
      %70 = dma.done [#allocation6], 6144
    $region53: #{tpu_custom_call.1} parent=1 // pred_fallthru
      _
    %v71 = vld [vmem:[%s0] sm:$0xff]
    %v72 = vld [vmem:[%s2] sm:$0xf]
    %v73 = vand.u32 2147483647, %v71
    %vm74 = vcmp.le.f32.partialorder %v73, 0.7853982
    %vm75 = vcmp.lt.s32.totalorder %v71, 0
    %v76 = vand.u32 %v71, 2139095040
    %v77 = vshrl.u32 %v76, 23
    %v78 = vsub.s32 %v77, 127
    %v79 = vand.u32 2147483647, %v71
    %v80 = vand.u32 %v79, 8388607
    %v81 = vor.u32 %v80, 8388608
    %v82 = vsub.s32 0, %v81
    %v83 = vadd.s32 %v78, 1
    %vm84 = vcmp.gt.s32.totalorder %v83, 0
    %v85 = vsel %vm84, %v83, 0
    %v86 = vshrl.u32 %v85, 5
    %v87 = vand.u32 %v85, 31
    %v88 = vsub.s32 32, %v87
    %v89 = vshrl.u32 683565275, %v88
    %v90 = vshll.u32 683565275, %v87
    %v91 = vshrl.u32 2475754826, %v88
    %v92 = vor.u32 %v90, %v91
    %v93 = vshll.u32 2475754826, %v87
    %v94 = vshrl.u32 2131351028, %v88
    %v95 = vor.u32 %v93, %v94
    %v96 = vshll.u32 2131351028, %v87
    %v97 = vshrl.u32 2102212464, %v88
    %v98 = vor.u32 %v96, %v97
    %v99 = vshll.u32 2102212464, %v87
    %v100 = vshrl.u32 920167782, %v88
    %v101 = vor.u32 %v99, %v100
    %v102 = vshll.u32 920167782, %v87
    %v103 = vshrl.u32 1326507024, %v88
    %v104 = vor.u32 %v102, %v103
    %vm105 = vcmp.lt.s32.totalorder %v86, 1
    %vm106 = vcmp.lt.s32.totalorder %v86, 2
    %vm107 = vcmp.lt.s32.totalorder %v86, 3
    %vm108 = vcmp.lt.s32.totalorder %v86, 4
    %v109 = vsel %vm105, %v89, %v92
    %v110 = vsel %vm108, %v98, 2102212464
    %v111 = vsel %vm107, %v95, %v110
    %v112 = vsel %vm106, %v109, %v111
    %v113 = vsel %vm105, %v92, %v95
    %v114 = vsel %vm108, %v101, 920167782
    %v115 = vsel %vm107, %v98, %v114
    %v116 = vsel %vm106, %v113, %v115
    %v117 = vsel %vm105, %v95, %v98
    %v118 = vsel %vm108, %v104, 1326507024
    %v119 = vsel %vm107, %v101, %v118
    %v120 = vsel %vm106, %v117, %v119
    %v121 = vshll.u32 %v81, 8
    %v122 = vand.u32 %v121, 65535
    %v123 = vshrl.u32 %v121, 16
    %v124 = vand.u32 %v120, 65535
    %v125 = vshrl.u32 %v120, 16
    %v126 = vmul.u32 %v122, %v124
    %v127 = vmul.u32 %v122, %v125
    %v128 = vmul.u32 %v123, %v124
    %v129 = vmul.u32 %v123, %v125
    %v130 = vshll.u32 %v127, 16
    %v131 = vshrl.u32 %v127, 16
    %v132 = vshll.u32 %v128, 16
    %v133 = vshrl.u32 %v128, 16
    %vm134 = vc.u32 %v126, %v130
    %v135 = vsel %vm134, 1, 0
    %v136 = vadd.s32 %v126, %v130
    %v137 = vadd.s32 %v129, %v135
    %vm138 = vc.u32 %v136, %v132
    %v139 = vsel %vm138, 1, 0
    %v140 = vadd.s32 %v136, %v132
    %v141 = vadd.s32 %v137, %v139
    %v142 = vadd.s32 %v141, %v131
    %v143 = vadd.s32 %v142, %v133
    %v144 = vand.u32 %v121, 65535
    %v145 = vshrl.u32 %v121, 16
    %v146 = vand.u32 %v116, 65535
    %v147 = vshrl.u32 %v116, 16
    %v148 = vmul.u32 %v144, %v146
    %v149 = vmul.u32 %v144, %v147
    %v150 = vmul.u32 %v145, %v146
    %v151 = vmul.u32 %v145, %v147
    %v152 = vshll.u32 %v149, 16
    %v153 = vshrl.u32 %v149, 16
    %v154 = vshll.u32 %v150, 16
    %v155 = vshrl.u32 %v150, 16
    %vm156 = vc.u32 %v148, %v152
    %v157 = vsel %vm156, 1, 0
    %v158 = vadd.s32 %v148, %v152
    %v159 = vadd.s32 %v151, %v157
    %vm160 = vc.u32 %v158, %v154
    %v161 = vsel %vm160, 1, 0
    %v162 = vadd.s32 %v158, %v154
    %v163 = vadd.s32 %v159, %v161
    %v164 = vadd.s32 %v163, %v153
    %v165 = vadd.s32 %v164, %v155
    %v166 = vmul.u32 %v121, %v112
    %v167 = vadd.s32 %v143, %v162
    %vm168 = vc.u32 %v143, %v162
    %v169 = vadd.s32 %v165, 1
    %v170 = vsel %vm168, %v169, %v165
    %v171 = vadd.s32 %v166, %v170
    %v172 = vadd.s32 %v171, 536870912
    %v173 = vshrl.u32 %v172, 30
    %v174 = vshll.u32 %v173, 30
    %v175 = vsub.s32 %v171, %v174
    %vm176 = vcmp.lt.s32.totalorder %v175, 0
    %v177 = vsub.s32 0, %v175
    %v178 = vsel %vm176, %v177, %v175
    %v179 = vclz %v178
    %v180 = vsub.s32 %v179, 2
    %vm181 = vcmp.gt.s32.totalorder 0, %v180
    %v182 = vsel %vm181, 0, %v180
    %v183 = vsub.s32 32, %v182
    %v184 = vshll.u32 %v175, %v182
    %v185 = vshrl.u32 %v167, %v183
    %v186 = vor.u32 %v184, %v185
    %v187 = vsub.s32 4294967266, %v182
    %v188 = vadd.s32 %v187, 127
    %v189 = vshll.u32 %v188, 23
    %v190 = vor.u32 4788187, %v189
    %v191 = vand.u32 2147483647, %v190
    %v193 = vcvt.s32.f32 %v186
    %v194 = vmul.f32 %v193, %v191
    %v195 = vxor.u32 %v194, 2147483648
    %v196 = vsel %vm75, %v195, %v194
    %v197 = vsub.s32 4, %v173
    %v198 = vsel %vm75, %v197, %v173
    %v199 = vsel %vm74, %v71, %v196
    %v200 = vsel %vm74, 0, %v198
    %v201 = vmul.f32 %v199, %v199
    %v202 = vmul.f32 %v201, -0.001358992
    %v203 = vadd.f32 %v202, 0.041655596
    %v204 = vmul.f32 %v201, %v203
    %v205 = vadd.f32 %v204, -0.4999988
    %v206 = vmul.f32 %v201, %v205
    %v207 = vadd.f32 1.0, %v206
    %v208 = vmul.f32 %v199, %v199
    %v209 = vmul.f32 %v208, -0.00019511016
    %v210 = vadd.f32 %v209, 0.008332121
    %v211 = vmul.f32 %v208, %v210
    %v212 = vadd.f32 %v211, -0.16666654
    %v213 = vmul.f32 %v208, %v212
    %v214 = vadd.f32 %v213, 1.0
    %v215 = vmul.f32 %v214, %v199
    %vm216 = vweird.f32 %v71
    %v217 = vadd.s32 %v200, 3
    %v218 = vand.u32 %v217, 3
    %vm219 = vcmp.lt.s32.totalorder %v218, 2
    %vm220 = vcmp.eq.s32.totalorder %v218, 0
    %v221 = vxor.u32 %v215, 2147483648
    %v222 = vsel %vm220, %v207, %v221
    %vm223 = vcmp.eq.s32.totalorder %v218, 2
    %v224 = vxor.u32 %v207, 2147483648
    %v225 = vsel %vm223, %v224, %v215
    %v226 = vsel %vm219, %v222, %v225
    %v227 = vsel %vm216, nan, %v226
    %229 = vset.pattern.permute.xlu0 0
    %230 = vperm.xlu0 %229, %v227
    %v231 = vpop.permute.xlu0 %230
    %v233 = vperm.slane %v72, 0
    %v234 = vmul.f32 %v231, %v233
    %v235 = vand.u32 2147483647, %v71
    %vm236 = vcmp.le.f32.partialorder %v235, 0.7853982
    %vm237 = vcmp.lt.s32.totalorder %v71, 0
    %v238 = vand.u32 %v71, 2139095040
    %v239 = vshrl.u32 %v238, 23
    %v240 = vsub.s32 %v239, 127
    %v241 = vand.u32 2147483647, %v71
    %v242 = vand.u32 %v241, 8388607
    %v243 = vor.u32 %v242, 8388608
    %v244 = vsub.s32 0, %v243
    %v245 = vadd.s32 %v240, 1
    %vm246 = vcmp.gt.s32.totalorder %v245, 0
    %v247 = vsel %vm246, %v245, 0
    %v248 = vshrl.u32 %v247, 5
    %v249 = vand.u32 %v247, 31
    %v250 = vsub.s32 32, %v249
    %v251 = vshrl.u32 683565275, %v250
    %v252 = vshll.u32 683565275, %v249
    %v253 = vshrl.u32 2475754826, %v250
    %v254 = vor.u32 %v252, %v253
    %v255 = vshll.u32 2475754826, %v249
    %v256 = vshrl.u32 2131351028, %v250
    %v257 = vor.u32 %v255, %v256
    %v258 = vshll.u32 2131351028, %v249
    %v259 = vshrl.u32 2102212464, %v250
    %v260 = vor.u32 %v258, %v259
    %v261 = vshll.u32 2102212464, %v249
    %v262 = vshrl.u32 920167782, %v250
    %v263 = vor.u32 %v261, %v262
    %v264 = vshll.u32 920167782, %v249
    %v265 = vshrl.u32 1326507024, %v250
    %v266 = vor.u32 %v264, %v265
    %vm267 = vcmp.lt.s32.totalorder %v248, 1
    %vm268 = vcmp.lt.s32.totalorder %v248, 2
    %vm269 = vcmp.lt.s32.totalorder %v248, 3
    %vm270 = vcmp.lt.s32.totalorder %v248, 4
    %v271 = vsel %vm267, %v251, %v254
    %v272 = vsel %vm270, %v260, 2102212464
    %v273 = vsel %vm269, %v257, %v272
    %v274 = vsel %vm268, %v271, %v273
    %v275 = vsel %vm267, %v254, %v257
    %v276 = vsel %vm270, %v263, 920167782
    %v277 = vsel %vm269, %v260, %v276
    %v278 = vsel %vm268, %v275, %v277
    %v279 = vsel %vm267, %v257, %v260
    %v280 = vsel %vm270, %v266, 1326507024
    %v281 = vsel %vm269, %v263, %v280
    %v282 = vsel %vm268, %v279, %v281
    %v283 = vshll.u32 %v243, 8
    %v284 = vand.u32 %v283, 65535
    %v285 = vshrl.u32 %v283, 16
    %v286 = vand.u32 %v282, 65535
    %v287 = vshrl.u32 %v282, 16
    %v288 = vmul.u32 %v284, %v286
    %v289 = vmul.u32 %v284, %v287
    %v290 = vmul.u32 %v285, %v286
    %v291 = vmul.u32 %v285, %v287
    %v292 = vshll.u32 %v289, 16
    %v293 = vshrl.u32 %v289, 16
    %v294 = vshll.u32 %v290, 16
    %v295 = vshrl.u32 %v290, 16
    %vm296 = vc.u32 %v288, %v292
    %v297 = vsel %vm296, 1, 0
    %v298 = vadd.s32 %v288, %v292
    %v299 = vadd.s32 %v291, %v297
    %vm300 = vc.u32 %v298, %v294
    %v301 = vsel %vm300, 1, 0
    %v302 = vadd.s32 %v298, %v294
    %v303 = vadd.s32 %v299, %v301
    %v304 = vadd.s32 %v303, %v293
    %v305 = vadd.s32 %v304, %v295
    %v306 = vand.u32 %v283, 65535
    %v307 = vshrl.u32 %v283, 16
    %v308 = vand.u32 %v278, 65535
    %v309 = vshrl.u32 %v278, 16
    %v310 = vmul.u32 %v306, %v308
    %v311 = vmul.u32 %v306, %v309
    %v312 = vmul.u32 %v307, %v308
    %v313 = vmul.u32 %v307, %v309
    %v314 = vshll.u32 %v311, 16
    %v315 = vshrl.u32 %v311, 16
    %v316 = vshll.u32 %v312, 16
    %v317 = vshrl.u32 %v312, 16
    %vm318 = vc.u32 %v310, %v314
    %v319 = vsel %vm318, 1, 0
    %v320 = vadd.s32 %v310, %v314
    %v321 = vadd.s32 %v313, %v319
    %vm322 = vc.u32 %v320, %v316
    %v323 = vsel %vm322, 1, 0
    %v324 = vadd.s32 %v320, %v316
    %v325 = vadd.s32 %v321, %v323
    %v326 = vadd.s32 %v325, %v315
    %v327 = vadd.s32 %v326, %v317
    %v328 = vmul.u32 %v283, %v274
    %v329 = vadd.s32 %v305, %v324
    %vm330 = vc.u32 %v305, %v324
    %v331 = vadd.s32 %v327, 1
    %v332 = vsel %vm330, %v331, %v327
    %v333 = vadd.s32 %v328, %v332
    %v334 = vadd.s32 %v333, 536870912
    %v335 = vshrl.u32 %v334, 30
    %v336 = vshll.u32 %v335, 30
    %v337 = vsub.s32 %v333, %v336
    %vm338 = vcmp.lt.s32.totalorder %v337, 0
    %v339 = vsub.s32 0, %v337
    %v340 = vsel %vm338, %v339, %v337
    %v341 = vclz %v340
    %v342 = vsub.s32 %v341, 2
    %vm343 = vcmp.gt.s32.totalorder 0, %v342
    %v344 = vsel %vm343, 0, %v342
    %v345 = vsub.s32 32, %v344
    %v346 = vshll.u32 %v337, %v344
    %v347 = vshrl.u32 %v329, %v345
    %v348 = vor.u32 %v346, %v347
    %v349 = vsub.s32 4294967266, %v344
    %v350 = vadd.s32 %v349, 127
    %v351 = vshll.u32 %v350, 23
    %v352 = vor.u32 4788187, %v351
    %v353 = vand.u32 2147483647, %v352
    %v355 = vcvt.s32.f32 %v348
    %v356 = vmul.f32 %v355, %v353
    %v357 = vxor.u32 %v356, 2147483648
    %v358 = vsel %vm237, %v357, %v356
    %v359 = vsub.s32 4, %v335
    %v360 = vsel %vm237, %v359, %v335
    %v361 = vsel %vm236, %v71, %v358
    %v362 = vsel %vm236, 0, %v360
    %v363 = vmul.f32 %v361, %v361
    %v364 = vmul.f32 %v363, -0.001358992
    %v365 = vadd.f32 %v364, 0.041655596
    %v366 = vmul.f32 %v363, %v365
    %v367 = vadd.f32 %v366, -0.4999988
    %v368 = vmul.f32 %v363, %v367
    %v369 = vadd.f32 1.0, %v368
    %v370 = vmul.f32 %v361, %v361
    %v371 = vmul.f32 %v370, -0.00019511016
    %v372 = vadd.f32 %v371, 0.008332121
    %v373 = vmul.f32 %v370, %v372
    %v374 = vadd.f32 %v373, -0.16666654
    %v375 = vmul.f32 %v370, %v374
    %v376 = vadd.f32 %v375, 1.0
    %v377 = vmul.f32 %v376, %v361
    %vm378 = vweird.f32 %v71
    %v379 = vand.u32 %v362, 3
    %vm380 = vcmp.lt.s32.totalorder %v379, 2
    %vm381 = vcmp.eq.s32.totalorder %v379, 0
    %v382 = vxor.u32 %v377, 2147483648
    %v383 = vsel %vm381, %v369, %v382
    %vm384 = vcmp.eq.s32.totalorder %v379, 2
    %v385 = vxor.u32 %v369, 2147483648
    %v386 = vsel %vm384, %v385, %v377
    %v387 = vsel %vm380, %v383, %v386
    %v388 = vsel %vm378, nan, %v387
    %390 = vset.pattern.permute.xlu0 0
    %391 = vperm.xlu0 %390, %v388
    %v392 = vpop.permute.xlu0 %391
    %v394 = vperm.slane %v72, 1
    %v395 = vmul.f32 %v392, %v394
    %v396 = vadd.f32 %v234, %v395
    %397 = vset.pattern.permute.xlu0 1
    %398 = vperm.xlu0 %397, %v227
    %v399 = vpop.permute.xlu0 %398
    %v401 = vperm.slane %v72, 2
    %v402 = vmul.f32 %v399, %v401
    %v403 = vadd.f32 %v396, %v402
    %404 = vset.pattern.permute.xlu0 1
    %405 = vperm.xlu0 %404, %v388
    %v406 = vpop.permute.xlu0 %405
    %v408 = vperm.slane %v72, 3
    %v409 = vmul.f32 %v406, %v408
    %v410 = vadd.f32 %v403, %v409
    %v411 = vld [vmem:[%s3] sm:$0x1]
    %v413 = vperm.slane %v411, 0
    %v415 = vadd.f32 %v410, %v413
    %v416 = vand.u32 2147483647, %v415
    %vm417 = vcmp.le.f32.partialorder %v416, 0.7853982
    %vm418 = vcmp.lt.s32.totalorder %v415, 0
    %v419 = vand.u32 %v415, 2139095040
    %v420 = vshrl.u32 %v419, 23
    %v421 = vsub.s32 %v420, 127
    %v422 = vand.u32 2147483647, %v415
    %v423 = vand.u32 %v422, 8388607
    %v424 = vor.u32 %v423, 8388608
    %v425 = vsub.s32 0, %v424
    %v426 = vadd.s32 %v421, 1
    %vm427 = vcmp.gt.s32.totalorder %v426, 0
    %v428 = vsel %vm427, %v426, 0
    %v429 = vshrl.u32 %v428, 5
    %v430 = vand.u32 %v428, 31
    %v431 = vsub.s32 32, %v430
    %v432 = vshrl.u32 683565275, %v431
    %v433 = vshll.u32 683565275, %v430
    %v434 = vshrl.u32 2475754826, %v431
    %v435 = vor.u32 %v433, %v434
    %v436 = vshll.u32 2475754826, %v430
    %v437 = vshrl.u32 2131351028, %v431
    %v438 = vor.u32 %v436, %v437
    %v439 = vshll.u32 2131351028, %v430
    %v440 = vshrl.u32 2102212464, %v431
    %v441 = vor.u32 %v439, %v440
    %v442 = vshll.u32 2102212464, %v430
    %v443 = vshrl.u32 920167782, %v431
    %v444 = vor.u32 %v442, %v443
    %v445 = vshll.u32 920167782, %v430
    %v446 = vshrl.u32 1326507024, %v431
    %v447 = vor.u32 %v445, %v446
    %vm448 = vcmp.lt.s32.totalorder %v429, 1
    %vm449 = vcmp.lt.s32.totalorder %v429, 2
    %vm450 = vcmp.lt.s32.totalorder %v429, 3
    %vm451 = vcmp.lt.s32.totalorder %v429, 4
    %v452 = vsel %vm448, %v432, %v435
    %v453 = vsel %vm451, %v441, 2102212464
    %v454 = vsel %vm450, %v438, %v453
    %v455 = vsel %vm449, %v452, %v454
    %v456 = vsel %vm448, %v435, %v438
    %v457 = vsel %vm451, %v444, 920167782
    %v458 = vsel %vm450, %v441, %v457
    %v459 = vsel %vm449, %v456, %v458
    %v460 = vsel %vm448, %v438, %v441
    %v461 = vsel %vm451, %v447, 1326507024
    %v462 = vsel %vm450, %v444, %v461
    %v463 = vsel %vm449, %v460, %v462
    %v464 = vshll.u32 %v424, 8
    %v465 = vand.u32 %v464, 65535
    %v466 = vshrl.u32 %v464, 16
    %v467 = vand.u32 %v463, 65535
    %v468 = vshrl.u32 %v463, 16
    %v469 = vmul.u32 %v465, %v467
    %v470 = vmul.u32 %v465, %v468
    %v471 = vmul.u32 %v466, %v467
    %v472 = vmul.u32 %v466, %v468
    %v473 = vshll.u32 %v470, 16
    %v474 = vshrl.u32 %v470, 16
    %v475 = vshll.u32 %v471, 16
    %v476 = vshrl.u32 %v471, 16
    %vm477 = vc.u32 %v469, %v473
    %v478 = vsel %vm477, 1, 0
    %v479 = vadd.s32 %v469, %v473
    %v480 = vadd.s32 %v472, %v478
    %vm481 = vc.u32 %v479, %v475
    %v482 = vsel %vm481, 1, 0
    %v483 = vadd.s32 %v479, %v475
    %v484 = vadd.s32 %v480, %v482
    %v485 = vadd.s32 %v484, %v474
    %v486 = vadd.s32 %v485, %v476
    %v487 = vand.u32 %v464, 65535
    %v488 = vshrl.u32 %v464, 16
    %v489 = vand.u32 %v459, 65535
    %v490 = vshrl.u32 %v459, 16
    %v491 = vmul.u32 %v487, %v489
    %v492 = vmul.u32 %v487, %v490
    %v493 = vmul.u32 %v488, %v489
    %v494 = vmul.u32 %v488, %v490
    %v495 = vshll.u32 %v492, 16
    %v496 = vshrl.u32 %v492, 16
    %v497 = vshll.u32 %v493, 16
    %v498 = vshrl.u32 %v493, 16
    %vm499 = vc.u32 %v491, %v495
    %v500 = vsel %vm499, 1, 0
    %v501 = vadd.s32 %v491, %v495
    %v502 = vadd.s32 %v494, %v500
    %vm503 = vc.u32 %v501, %v497
    %v504 = vsel %vm503, 1, 0
    %v505 = vadd.s32 %v501, %v497
    %v506 = vadd.s32 %v502, %v504
    %v507 = vadd.s32 %v506, %v496
    %v508 = vadd.s32 %v507, %v498
    %v509 = vmul.u32 %v464, %v455
    %v510 = vadd.s32 %v486, %v505
    %vm511 = vc.u32 %v486, %v505
    %v512 = vadd.s32 %v508, 1
    %v513 = vsel %vm511, %v512, %v508
    %v514 = vadd.s32 %v509, %v513
    %v515 = vadd.s32 %v514, 536870912
    %v516 = vshrl.u32 %v515, 30
    %v517 = vshll.u32 %v516, 30
    %v518 = vsub.s32 %v514, %v517
    %vm519 = vcmp.lt.s32.totalorder %v518, 0
    %v520 = vsub.s32 0, %v518
    %v521 = vsel %vm519, %v520, %v518
    %v522 = vclz %v521
    %v523 = vsub.s32 %v522, 2
    %vm524 = vcmp.gt.s32.totalorder 0, %v523
    %v525 = vsel %vm524, 0, %v523
    %v526 = vsub.s32 32, %v525
    %v527 = vshll.u32 %v518, %v525
    %v528 = vshrl.u32 %v510, %v526
    %v529 = vor.u32 %v527, %v528
    %v530 = vsub.s32 4294967266, %v525
    %v531 = vadd.s32 %v530, 127
    %v532 = vshll.u32 %v531, 23
    %v533 = vor.u32 4788187, %v532
    %v534 = vand.u32 2147483647, %v533
    %v536 = vcvt.s32.f32 %v529
    %v537 = vmul.f32 %v536, %v534
    %v538 = vxor.u32 %v537, 2147483648
    %v539 = vsel %vm418, %v538, %v537
    %v540 = vsub.s32 4, %v516
    %v541 = vsel %vm418, %v540, %v516
    %v542 = vsel %vm417, %v415, %v539
    %v543 = vsel %vm417, 0, %v541
    %v544 = vmul.f32 %v542, %v542
    %v545 = vmul.f32 %v544, -0.001358992
    %v546 = vadd.f32 %v545, 0.041655596
    %v547 = vmul.f32 %v544, %v546
    %v548 = vadd.f32 %v547, -0.4999988
    %v549 = vmul.f32 %v544, %v548
    %v550 = vadd.f32 1.0, %v549
    %v551 = vmul.f32 %v542, %v542
    %v552 = vmul.f32 %v551, -0.00019511016
    %v553 = vadd.f32 %v552, 0.008332121
    %v554 = vmul.f32 %v551, %v553
    %v555 = vadd.f32 %v554, -0.16666654
    %v556 = vmul.f32 %v551, %v555
    %v557 = vadd.f32 %v556, 1.0
    %v558 = vmul.f32 %v557, %v542
    %vm559 = vweird.f32 %v415
    %v560 = vadd.s32 %v543, 3
    %v561 = vand.u32 %v560, 3
    %vm562 = vcmp.lt.s32.totalorder %v561, 2
    %vm563 = vcmp.eq.s32.totalorder %v561, 0
    %v564 = vxor.u32 %v558, 2147483648
    %v565 = vsel %vm563, %v550, %v564
    %vm566 = vcmp.eq.s32.totalorder %v561, 2
    %v567 = vxor.u32 %v550, 2147483648
    %v568 = vsel %vm566, %v567, %v558
    %v569 = vsel %vm562, %v565, %v568
    %v570 = vsel %vm559, nan, %v569
    %v571 = vld [vmem:[#allocation2] sm:$0xff]
    %v572 = vld [vmem:[#allocation2 + $0x8] sm:$0xff]
    %v573 = vld [vmem:[#allocation2 + $0x10] sm:$0xff]
    %v574 = vld [vmem:[#allocation2 + $0x18] sm:$0xff]
    %v575 = vld [vmem:[#allocation2 + $0x20] sm:$0xff]
    %v576 = vld [vmem:[#allocation2 + $0x28] sm:$0xff]
    %v577 = vld [vmem:[#allocation2 + $0x30] sm:$0xff]
    %v578 = vld [vmem:[#allocation2 + $0x38] sm:$0xff]
    %v579 = vld [vmem:[#allocation2 + $0x40] sm:$0xff]
    %v580 = vld [vmem:[#allocation2 + $0x48] sm:$0xff]
    %v581 = vld [vmem:[#allocation2 + $0x50] sm:$0xff]
    %v582 = vld [vmem:[#allocation2 + $0x58] sm:$0xff]
    %v583 = vld [vmem:[#allocation2 + $0x60] sm:$0xff]
    %v584 = vld [vmem:[#allocation2 + $0x68] sm:$0xff]
    %v585 = vld [vmem:[#allocation2 + $0x70] sm:$0xff]
    %v586 = vld [vmem:[#allocation2 + $0x78] sm:$0xff]
    %v587 = vld [vmem:[%s1] sm:$0xff]
    %588 = vmatpush.msra.mxu0 %v586
    %589 = vmatpush.msra.mxu0 %v585
    %590 = vmatpush.msra.mxu0 %v584
    %591 = vmatpush.msra.mxu0 %v583
    %592 = vmatpush.msra.mxu0 %v582
    %593 = vmatpush.msra.mxu0 %v581
    %594 = vmatpush.msra.mxu0 %v580
    %595 = vmatpush.msra.mxu0 %v579
    %596 = vmatpush.msra.mxu0 %v578
    %597 = vmatpush.msra.mxu0 %v577
    %598 = vmatpush.msra.mxu0 %v576
    %599 = vmatpush.msra.mxu0 %v575
    %600 = vmatpush.msra.mxu0 %v574
    %601 = vmatpush.msra.mxu0 %v573
    %602 = vmatpush.msra.mxu0 %v572
    %603 = vmatpush.msra.mxu0 %v571
    %604 = vmatmul.f32.gmra.mxu0 %v570
    %v605 = vpop.f32.mrf.mxu0
    %v606 = vadd.f32 %v587, %v605
    %607 = vdwg.mxu0
    %v608 = vmul.f32 %v606, 0.5
    %v609 = vmul.f32 %v606, 0.70710677
    %v610 = vmul.f32 %v609, %v609
    %v611 = vmin.f32 16.0, %v610
    %v612 = vmul.f32 %v611, 2.1237322e-06
    %v613 = vadd.f32 %v612, 0.00028619796
    %v614 = vmul.f32 %v611, %v613
    %v615 = vadd.f32 %v614, 0.0036580483
    %v616 = vmul.f32 %v611, %v615
    %v617 = vadd.f32 %v616, 0.05243302
    %v618 = vmul.f32 %v611, %v617
    %v619 = vadd.f32 %v618, 0.18741608
    %v620 = vmul.f32 %v611, %v619
    %v621 = vadd.f32 %v620, 1.1283791
    %v622 = vmul.f32 %v609, %v621
    %v623 = vmul.f32 %v611, 3.8918573e-05
    %v624 = vadd.f32 %v623, 0.001143296
    %v625 = vmul.f32 %v611, %v624
    %v626 = vadd.f32 %v625, 0.014752088
    %v627 = vmul.f32 %v611, %v626
    %v628 = vadd.f32 %v627, 0.112945676
    %v629 = vmul.f32 %v611, %v628
    %v630 = vadd.f32 %v629, 0.4994258
    %v631 = vmul.f32 %v611, %v630
    %v632 = vadd.f32 %v631, 1.0
    %v633 = vrcp.pop %v632
    %v634 = vmul.f32 %v632, %v633
    %v635 = vsub.f32 1.0, %v634
    %v636 = vmul.f32 %v633, %v635
    %v637 = vadd.f32 %v633, %v636
    %vm638 = vweird.f32 %v632
    %vm639 = vweird.f32 %v633
    %vm640 = vmor %vm638, %vm639
    %v641 = vsel %vm640, %v633, %v637
    %v642 = vand.u32 2147483647, %v632
    %vm643 = vcmp.eq.f32.partialorder %v642, 8.507059e+37
    %v644 = vand.u32 %v632, 2147483648
    %v645 = vor.u32 1.1754944e-38, %v644
    %v646 = vsel %vm643, %v645, %v641
    %v647 = vmul.f32 %v622, %v646
    %v648 = vmin.f32 %v647, 1.0
    %v649 = vmax.f32 %v648, -1.0
    %v650 = vadd.f32 %v649, 1.0
    %v651 = vmul.f32 %v608, %v650
    %v652 = vld [vmem:[%s7] sm:$0xff]
    %v653 = vld [vmem:[%s7 + $0x8] sm:$0xff]
    %v654 = vld [vmem:[%s7 + $0x10] sm:$0xff]
    %v655 = vld [vmem:[%s7 + $0x18] sm:$0xff]
    %v656 = vld [vmem:[%s7 + $0x20] sm:$0xff]
    %v657 = vld [vmem:[%s7 + $0x28] sm:$0xff]
    %v658 = vld [vmem:[%s7 + $0x30] sm:$0xff]
    %v659 = vld [vmem:[%s7 + $0x38] sm:$0xff]
    %v660 = vld [vmem:[%s7 + $0x40] sm:$0xff]
    %v661 = vld [vmem:[%s7 + $0x48] sm:$0xff]
    %v662 = vld [vmem:[%s7 + $0x50] sm:$0xff]
    %v663 = vld [vmem:[%s7 + $0x58] sm:$0xff]
    %v664 = vld [vmem:[%s7 + $0x60] sm:$0xff]
    %v665 = vld [vmem:[%s7 + $0x68] sm:$0xff]
    %v666 = vld [vmem:[%s7 + $0x70] sm:$0xff]
    %v667 = vld [vmem:[%s7 + $0x78] sm:$0xff]
    %v668 = vld [vmem:[%s8] sm:$0x1]
    %v670 = vperm.slane %v668, 0
    %672 = vmatpush.msra.mxu0 %v667
    %673 = vmatpush.msra.mxu0 %v666
    %674 = vmatpush.msra.mxu0 %v665
    %675 = vmatpush.msra.mxu0 %v664
    %676 = vmatpush.msra.mxu0 %v663
    %677 = vmatpush.msra.mxu0 %v662
    %678 = vmatpush.msra.mxu0 %v661
    %679 = vmatpush.msra.mxu0 %v660
    %680 = vmatpush.msra.mxu0 %v659
    %681 = vmatpush.msra.mxu0 %v658
    %682 = vmatpush.msra.mxu0 %v657
    %683 = vmatpush.msra.mxu0 %v656
    %684 = vmatpush.msra.mxu0 %v655
    %685 = vmatpush.msra.mxu0 %v654
    %686 = vmatpush.msra.mxu0 %v653
    %687 = vmatpush.msra.mxu0 %v652
    %688 = vmatmul.f32.gmra.mxu0 %v651
    %v689 = vpop.f32.mrf.mxu0
    %v690 = vadd.f32 %v670, %v689
    %691 = vdwg.mxu0
    %v692 = vmul.f32 %v690, 0.5
    %v693 = vmul.f32 %v690, 0.70710677
    %v694 = vmul.f32 %v693, %v693
    %v695 = vmin.f32 16.0, %v694
    %v696 = vmul.f32 %v695, 2.1237322e-06
    %v697 = vadd.f32 %v696, 0.00028619796
    %v698 = vmul.f32 %v695, %v697
    %v699 = vadd.f32 %v698, 0.0036580483
    %v700 = vmul.f32 %v695, %v699
    %v701 = vadd.f32 %v700, 0.05243302
    %v702 = vmul.f32 %v695, %v701
    %v703 = vadd.f32 %v702, 0.18741608
    %v704 = vmul.f32 %v695, %v703
    %v705 = vadd.f32 %v704, 1.1283791
    %v706 = vmul.f32 %v693, %v705
    %v707 = vmul.f32 %v695, 3.8918573e-05
    %v708 = vadd.f32 %v707, 0.001143296
    %v709 = vmul.f32 %v695, %v708
    %v710 = vadd.f32 %v709, 0.014752088
    %v711 = vmul.f32 %v695, %v710
    %v712 = vadd.f32 %v711, 0.112945676
    %v713 = vmul.f32 %v695, %v712
    %v714 = vadd.f32 %v713, 0.4994258
    %v715 = vmul.f32 %v695, %v714
    %v716 = vadd.f32 %v715, 1.0
    %v717 = vrcp.pop %v716
    %v718 = vmul.f32 %v716, %v717
    %v719 = vsub.f32 1.0, %v718
    %v720 = vmul.f32 %v717, %v719
    %v721 = vadd.f32 %v717, %v720
    %vm722 = vweird.f32 %v716
    %vm723 = vweird.f32 %v717
    %vm724 = vmor %vm722, %vm723
    %v725 = vsel %vm724, %v717, %v721
    %v726 = vand.u32 2147483647, %v716
    %vm727 = vcmp.eq.f32.partialorder %v726, 8.507059e+37
    %v728 = vand.u32 %v716, 2147483648
    %v729 = vor.u32 1.1754944e-38, %v728
    %v730 = vsel %vm727, %v729, %v725
    %v731 = vmul.f32 %v706, %v730
    %v732 = vmin.f32 %v731, 1.0
    %v733 = vmax.f32 %v732, -1.0
    %v734 = vadd.f32 %v733, 1.0
    %v735 = vmul.f32 %v692, %v734
    %v736 = vld [vmem:[#allocation5] sm:$0xff]
    %v737 = vld [vmem:[#allocation5 + $0x8] sm:$0xff]
    %v738 = vld [vmem:[#allocation5 + $0x10] sm:$0xff]
    %v739 = vld [vmem:[#allocation5 + $0x18] sm:$0xff]
    %v740 = vld [vmem:[#allocation5 + $0x20] sm:$0xff]
    %v741 = vld [vmem:[#allocation5 + $0x28] sm:$0xff]
    %v742 = vld [vmem:[#allocation5 + $0x30] sm:$0xff]
    %v743 = vld [vmem:[#allocation5 + $0x38] sm:$0xff]
    %v744 = vld [vmem:[#allocation5 + $0x40] sm:$0xff]
    %v745 = vld [vmem:[#allocation5 + $0x48] sm:$0xff]
    %v746 = vld [vmem:[#allocation5 + $0x50] sm:$0xff]
    %v747 = vld [vmem:[#allocation5 + $0x58] sm:$0xff]
    %v748 = vld [vmem:[#allocation5 + $0x60] sm:$0xff]
    %v749 = vld [vmem:[#allocation5 + $0x68] sm:$0xff]
    %v750 = vld [vmem:[#allocation5 + $0x70] sm:$0xff]
    %v751 = vld [vmem:[#allocation5 + $0x78] sm:$0xff]
    %v752 = vld [vmem:[#allocation5 + $0x80] sm:$0xff]
    %v753 = vld [vmem:[#allocation5 + $0x88] sm:$0xff]
    %v754 = vld [vmem:[#allocation5 + $0x90] sm:$0xff]
    %v755 = vld [vmem:[#allocation5 + $0x98] sm:$0xff]
    %v756 = vld [vmem:[#allocation5 + $0xa0] sm:$0xff]
    %v757 = vld [vmem:[#allocation5 + $0xa8] sm:$0xff]
    %v758 = vld [vmem:[#allocation5 + $0xb0] sm:$0xff]
    %v759 = vld [vmem:[#allocation5 + $0xb8] sm:$0xff]
    %v760 = vld [vmem:[#allocation5 + $0xc0] sm:$0xff]
    %v761 = vld [vmem:[#allocation5 + $0xc8] sm:$0xff]
    %v762 = vld [vmem:[#allocation5 + $0xd0] sm:$0xff]
    %v763 = vld [vmem:[#allocation5 + $0xd8] sm:$0xff]
    %v764 = vld [vmem:[#allocation5 + $0xe0] sm:$0xff]
    %v765 = vld [vmem:[#allocation5 + $0xe8] sm:$0xff]
    %v766 = vld [vmem:[#allocation5 + $0xf0] sm:$0xff]
    %v767 = vld [vmem:[#allocation5 + $0xf8] sm:$0xff]
    %v768 = vld [vmem:[#allocation5 + $0x100] sm:$0xff]
    %v769 = vld [vmem:[#allocation5 + $0x108] sm:$0xff]
    %v770 = vld [vmem:[#allocation5 + $0x110] sm:$0xff]
    %v771 = vld [vmem:[#allocation5 + $0x118] sm:$0xff]
    %v772 = vld [vmem:[#allocation5 + $0x120] sm:$0xff]
    %v773 = vld [vmem:[#allocation5 + $0x128] sm:$0xff]
    %v774 = vld [vmem:[#allocation5 + $0x130] sm:$0xff]
    %v775 = vld [vmem:[#allocation5 + $0x138] sm:$0xff]
    %v776 = vld [vmem:[#allocation5 + $0x140] sm:$0xff]
    %v777 = vld [vmem:[#allocation5 + $0x148] sm:$0xff]
    %v778 = vld [vmem:[#allocation5 + $0x150] sm:$0xff]
    %v779 = vld [vmem:[#allocation5 + $0x158] sm:$0xff]
    %v780 = vld [vmem:[#allocation5 + $0x160] sm:$0xff]
    %v781 = vld [vmem:[#allocation5 + $0x168] sm:$0xff]
    %v782 = vld [vmem:[#allocation5 + $0x170] sm:$0xff]
    %v783 = vld [vmem:[#allocation5 + $0x178] sm:$0xff]
    %v784 = vld [vmem:[%s6] sm:$0x7]
    %v786 = vperm.slane %v784, 0
    %v787 = vperm.slane %v784, 1
    %v788 = vperm.slane %v784, 2
    %792 = vmatpush.msra.mxu0 %v781
    %793 = vmatpush.msra.mxu0 %v778
    %794 = vmatpush.msra.mxu0 %v775
    %795 = vmatpush.msra.mxu0 %v772
    %796 = vmatpush.msra.mxu0 %v769
    %797 = vmatpush.msra.mxu0 %v766
    %798 = vmatpush.msra.mxu0 %v763
    %799 = vmatpush.msra.mxu0 %v760
    %800 = vmatpush.msra.mxu0 %v757
    %801 = vmatpush.msra.mxu0 %v754
    %802 = vmatpush.msra.mxu0 %v751
    %803 = vmatpush.msra.mxu0 %v748
    %804 = vmatpush.msra.mxu0 %v745
    %805 = vmatpush.msra.mxu0 %v742
    %806 = vmatpush.msra.mxu0 %v739
    %807 = vmatpush.msra.mxu0 %v736
    %808 = vmatmul.f32.gmra.mxu0 %v651
    %v809 = vpop.f32.mrf.mxu0
    %v810 = vadd.f32 %v786, %v809
    %811 = vdwg.mxu0
    %812 = vmatpush.msra.mxu0 %v782
    %813 = vmatpush.msra.mxu0 %v779
    %814 = vmatpush.msra.mxu0 %v776
    %815 = vmatpush.msra.mxu0 %v773
    %816 = vmatpush.msra.mxu0 %v770
    %817 = vmatpush.msra.mxu0 %v767
    %818 = vmatpush.msra.mxu0 %v764
    %819 = vmatpush.msra.mxu0 %v761
    %820 = vmatpush.msra.mxu0 %v758
    %821 = vmatpush.msra.mxu0 %v755
    %822 = vmatpush.msra.mxu0 %v752
    %823 = vmatpush.msra.mxu0 %v749
    %824 = vmatpush.msra.mxu0 %v746
    %825 = vmatpush.msra.mxu0 %v743
    %826 = vmatpush.msra.mxu0 %v740
    %827 = vmatpush.msra.mxu0 %v737
    %828 = vmatmul.f32.gmra.mxu0 %v651
    %v829 = vpop.f32.mrf.mxu0
    %v830 = vadd.f32 %v787, %v829
    %831 = vdwg.mxu0
    %832 = vmatpush.msra.mxu0 %v783
    %833 = vmatpush.msra.mxu0 %v780
    %834 = vmatpush.msra.mxu0 %v777
    %835 = vmatpush.msra.mxu0 %v774
    %836 = vmatpush.msra.mxu0 %v771
    %837 = vmatpush.msra.mxu0 %v768
    %838 = vmatpush.msra.mxu0 %v765
    %839 = vmatpush.msra.mxu0 %v762
    %840 = vmatpush.msra.mxu0 %v759
    %841 = vmatpush.msra.mxu0 %v756
    %842 = vmatpush.msra.mxu0 %v753
    %843 = vmatpush.msra.mxu0 %v750
    %844 = vmatpush.msra.mxu0 %v747
    %845 = vmatpush.msra.mxu0 %v744
    %846 = vmatpush.msra.mxu0 %v741
    %847 = vmatpush.msra.mxu0 %v738
    %848 = vmatmul.f32.gmra.mxu0 %v651
    %v849 = vpop.f32.mrf.mxu0
    %v850 = vadd.f32 %v788, %v849
    %851 = vdwg.mxu0
    %v852 = vld [vmem:[%s9] sm:$0xff]
    %v853 = vld [vmem:[%s9 + $0x8] sm:$0xff]
    %v854 = vld [vmem:[%s9 + $0x10] sm:$0xff]
    %v855 = vld [vmem:[%s9 + $0x18] sm:$0xff]
    %v856 = vld [vmem:[%s9 + $0x20] sm:$0xff]
    %v857 = vld [vmem:[%s9 + $0x28] sm:$0xff]
    %v858 = vld [vmem:[%s9 + $0x30] sm:$0xff]
    %v859 = vld [vmem:[%s9 + $0x38] sm:$0xff]
    %v860 = vld [vmem:[%s9 + $0x40] sm:$0xff]
    %v861 = vld [vmem:[%s9 + $0x48] sm:$0xff]
    %v862 = vld [vmem:[%s9 + $0x50] sm:$0xff]
    %v863 = vld [vmem:[%s9 + $0x58] sm:$0xff]
    %v864 = vld [vmem:[%s9 + $0x60] sm:$0xff]
    %v865 = vld [vmem:[%s9 + $0x68] sm:$0xff]
    %v866 = vld [vmem:[%s9 + $0x70] sm:$0xff]
    %v867 = vld [vmem:[%s9 + $0x78] sm:$0xff]
    %v868 = vld [vmem:[%s9 + $0x80] sm:$0xff]
    %v869 = vld [vmem:[%s9 + $0x88] sm:$0xff]
    %v870 = vld [vmem:[%s9 + $0x90] sm:$0xff]
    %v871 = vld [vmem:[%s9 + $0x98] sm:$0xff]
    %v872 = vld [vmem:[%s9 + $0xa0] sm:$0xff]
    %v873 = vld [vmem:[%s9 + $0xa8] sm:$0xff]
    %v874 = vld [vmem:[%s9 + $0xb0] sm:$0xff]
    %v875 = vld [vmem:[%s9 + $0xb8] sm:$0xff]
    %vm876 = vcmask 523264
    %v878 = vsel %vm876, %v735, 0
    %880 = vmatpush.msra.mxu0 0.0
    %881 = vmatpush.msra.mxu0 0.0
    %882 = vmatpush.msra.mxu0 0.0
    %883 = vmatpush.msra.mxu0 0.0
    %884 = vmatpush.msra.mxu0 0.0
    %885 = vmatpush.msra.mxu0 0.0
    %886 = vmatpush.msra.mxu0 0.0
    %887 = vmatpush.msra.mxu0 0.0
    %888 = vmatpush.msra.mxu0 %v873
    %889 = vmatpush.msra.mxu0 %v870
    %890 = vmatpush.msra.mxu0 %v867
    %891 = vmatpush.msra.mxu0 %v864
    %892 = vmatpush.msra.mxu0 %v861
    %893 = vmatpush.msra.mxu0 %v858
    %894 = vmatpush.msra.mxu0 %v855
    %895 = vmatpush.msra.mxu0 %v852
    %896 = vmatmul.f32.gmra.mxu0 %v878
    %v897 = vpop.f32.mrf.mxu0
    %v898 = vadd.f32 0.0, %v897
    %899 = vdwg.mxu0
    %900 = vmatpush.msra.mxu0 0.0
    %901 = vmatpush.msra.mxu0 0.0
    %902 = vmatpush.msra.mxu0 0.0
    %903 = vmatpush.msra.mxu0 0.0
    %904 = vmatpush.msra.mxu0 0.0
    %905 = vmatpush.msra.mxu0 0.0
    %906 = vmatpush.msra.mxu0 0.0
    %907 = vmatpush.msra.mxu0 0.0
    %908 = vmatpush.msra.mxu0 %v874
    %909 = vmatpush.msra.mxu0 %v871
    %910 = vmatpush.msra.mxu0 %v868
    %911 = vmatpush.msra.mxu0 %v865
    %912 = vmatpush.msra.mxu0 %v862
    %913 = vmatpush.msra.mxu0 %v859
    %914 = vmatpush.msra.mxu0 %v856
    %915 = vmatpush.msra.mxu0 %v853
    %916 = vmatmul.f32.gmra.mxu0 %v878
    %v917 = vpop.f32.mrf.mxu0
    %v918 = vadd.f32 0.0, %v917
    %919 = vdwg.mxu0
    %920 = vmatpush.msra.mxu0 0.0
    %921 = vmatpush.msra.mxu0 0.0
    %922 = vmatpush.msra.mxu0 0.0
    %923 = vmatpush.msra.mxu0 0.0
    %924 = vmatpush.msra.mxu0 0.0
    %925 = vmatpush.msra.mxu0 0.0
    %926 = vmatpush.msra.mxu0 0.0
    %927 = vmatpush.msra.mxu0 0.0
    %928 = vmatpush.msra.mxu0 %v875
    %929 = vmatpush.msra.mxu0 %v872
    %930 = vmatpush.msra.mxu0 %v869
    %931 = vmatpush.msra.mxu0 %v866
    %932 = vmatpush.msra.mxu0 %v863
    %933 = vmatpush.msra.mxu0 %v860
    %934 = vmatpush.msra.mxu0 %v857
    %935 = vmatpush.msra.mxu0 %v854
    %936 = vmatmul.f32.gmra.mxu0 %v878
    %v937 = vpop.f32.mrf.mxu0
    %v938 = vadd.f32 0.0, %v937
    %939 = vdwg.mxu0
    %v940 = vadd.f32 %v810, %v898
    %v941 = vadd.f32 %v830, %v918
    %v942 = vadd.f32 %v850, %v938
    %v943 = vld [vmem:[%s10] sm:$0x7]
    %v945 = vperm.slane %v943, 0
    %v946 = vperm.slane %v943, 1
    %v947 = vperm.slane %v943, 2
    %v951 = vadd.f32 %v940, %v945
    %v952 = vadd.f32 %v941, %v946
    %v953 = vadd.f32 %v942, %v947
    %954 = vst [vmem:[#allocation7] sm:$0xff] %v951
    %955 = vst [vmem:[#allocation7 + $0x8] sm:$0xff] %v952
    %956 = vst [vmem:[#allocation7 + $0x10] sm:$0xff] %v953
    // Predicated region
    $region54: #{tpu_custom_call.1} parent=1 // pred_check
      _
    $region55: #{tpu_custom_call.1} parent=1 // pred_check_branch
      %958 = sbr.rel (0) target = $region57
    $region56: #{tpu_custom_call.1} parent=1 // pred_region
      %960 = vsyncadd [#allocation4], 0
      %s962 = sshll.u32 [#allocation7], 4
      %s963 = int_to_ptr.vmem [resolvable:$true] %s962
      %s964 = sshll.u32 %s11, 4
      %s965 = int_to_ptr.hbm [resolvable:$true] %s964
      %967 = dma.vmem_to_hbm [thread:$0]  %s963, 384, %s965, [#allocation4]
    $region57: #{tpu_custom_call.1} parent=1 // pred_fallthru
      _
    // Predicated region
    $region58: #{tpu_custom_call.1} parent=1 // pred_check
      _
    $region59: #{tpu_custom_call.1} parent=1 // pred_check_branch
      %969 = sbr.rel (0) target = $region61
    $region60: #{tpu_custom_call.1} parent=1 // pred_region
      %971 = dma.done [#allocation4], 384
    $region61: #{tpu_custom_call.1} parent=1 // pred_fallthru
      _
    %972 = vsyncpa [#allocation3], 1
    %973 = vsyncpa [#allocation6], 1
    %974 = vsyncpa [#allocation4], 1

</llo_original>
